<compile_context>
chip_gen: v6e
topology: v6e:2x2x1
jax: 0.10.0
libtpu: 0.0.40
codegen_flags: <defaults>
</compile_context>

<pallas_src>
import functools

import jax
import jax.numpy as jnp
from jax.experimental import pallas as pl
from jax.experimental.pallas import tpu as pltpu

NUM_JOINTS = 25
BN_EPS = 1e-5
HIDDEN = 64
MAX_TILE_JT = 8192   # keeps double-buffered VMEM < v5e's 16 MiB scoped default


def _embed_kernel(x_ref, scale_ref, shift_ref, w1t_ref, w2t_ref, o_ref, *,
                  cin, mxu_bf16):
    # x_ref:     (Cin, tile)    channel-major slab of one batch's (J*T) columns
    # scale_ref: (Cin, tile)    folded eval-mode BN scale (per (c, joint), bcast over T)
    # shift_ref: (Cin, tile)    folded eval-mode BN shift
    # w1t_ref:   (HIDDEN, Cin)  first 1x1 conv weight, transposed
    # w2t_ref:   (D1, HIDDEN)   second 1x1 conv weight, transposed
    # o_ref:     (D1, tile)     lane-dense output slab
    xn = x_ref[...] * scale_ref[...] + shift_ref[...]        # BatchNorm (eval) as affine
    w1t = w1t_ref[...]

    # First 1x1 conv (Cin -> 64) on the VPU: Cin is tiny (3), so Cin broadcast
    # multiply-adds instead of an MXU pass on a 3-wide contraction; these
    # overlap with the MXU matmul below (the MXU has large slack anyway).
    h = w1t[:, 0:1] * xn[0:1, :]
    for c in range(1, cin):
        h = h + w1t[:, c:c + 1] * xn[c:c + 1, :]
    h = jnp.maximum(h, 0.0)                                  # ReLU
    if mxu_bf16:
        h = h.astype(jnp.bfloat16)                           # bf16-native MXU path (v5e)

    # Second 1x1 conv (64 -> D1) on the MXU, f32 accumulation.
    o = jnp.dot(w2t_ref[...], h, preferred_element_type=jnp.float32)
    o_ref[...] = jnp.maximum(o, 0.0).astype(o_ref.dtype)     # ReLU


def embed_forward(x, params, *, tile_jt=4096, out_dtype=jnp.float32,
                  mxu_bf16=False):
    """x: (B, C, J, T) float32, NCHW like the PyTorch module.

    out_dtype=jnp.bfloat16 halves the dominant HBM writeback if downstream
    layers accept it (output bytes are ~43x the input bytes).
    """
    B, C, J, T = x.shape
    assert J == NUM_JOINTS, "norm_data hard-codes 25 joints"
    w1, w2 = params["w1"], params["w2"]              # (C, 64), (64, D1)
    gamma, beta = params["gamma"], params["beta"]    # (C*J,), (C*J,)
    rmean, rvar = params["rmean"], params["rvar"]    # (C*J,), (C*J,)
    D1 = w2.shape[1]
    JT = J * T

    # Fold eval-mode BatchNorm1d(C*J) into per-(c, j) scale & shift, then
    # broadcast to (C, J*T): tiny, batch-independent arrays.
    inv_std = gamma / jnp.sqrt(rvar + BN_EPS)                    # (C*J,)
    scale_cj = inv_std.reshape(C, J)
    shift_cj = (beta - rmean * inv_std).reshape(C, J)
    scale_cjt = jnp.broadcast_to(scale_cj[:, :, None], (C, J, T)).reshape(C, JT)
    shift_cjt = jnp.broadcast_to(shift_cj[:, :, None], (C, J, T)).reshape(C, JT)

    # Channel-major layout: stay in NCHW, just flatten the spatial dims so the
    # kernel reads (C, tile) and writes lane-dense (D1, tile) blocks directly.
    # No jnp.pad here — the grid's partial last block handles the tail.
    x_flat = x.reshape(B, C, JT)

    # Tile selection: cover a whole batch row when it fits (1 step / batch);
    # for B==1 keep >=2 spatial steps so both v7x TensorCores get work.
    tile_cap = pl.cdiv(JT, 128) * 128
    if B == 1 and JT > 128:
        tile_cap = pl.cdiv(pl.cdiv(JT, 2), 128) * 128
    tile_jt = max(128, min(tile_jt, MAX_TILE_JT, tile_cap))
    n_jt = pl.cdiv(JT, tile_jt)

    w1t = w1.T                                                   # (HIDDEN, C)
    w2t = w2.T.astype(jnp.bfloat16) if mxu_bf16 else w2.T        # (D1, HIDDEN)

    kernel = functools.partial(_embed_kernel, cin=C, mxu_bf16=mxu_bf16)

    # Grid order (spatial, batch): scale/shift block index is constant across
    # the inner batch loop, so their DMAs are skipped on batch-only steps.
    out = pl.pallas_call(
        kernel,
        out_shape=jax.ShapeDtypeStruct((B, D1, JT), out_dtype),
        grid_spec=pltpu.PrefetchScalarGridSpec(
            num_scalar_prefetch=0,
            grid=(n_jt, B),
            in_specs=[
                pl.BlockSpec((None, C, tile_jt), lambda j, b: (b, 0, j)),
                pl.BlockSpec((C, tile_jt), lambda j, b: (0, j)),
                pl.BlockSpec((C, tile_jt), lambda j, b: (0, j)),
                pl.BlockSpec((HIDDEN, C), lambda j, b: (0, 0)),
                pl.BlockSpec((D1, HIDDEN), lambda j, b: (0, 0)),
            ],
            out_specs=pl.BlockSpec((None, D1, tile_jt), lambda j, b: (b, 0, j)),
        ),
        compiler_params=pltpu.CompilerParams(
            dimension_semantics=("parallel", "parallel")),
    )(x_flat, scale_cjt, shift_cjt, w1t, w2t)

    # Pure reshape (no transpose, no slice) back to NCHW (B, D1, J, T).
    return out.reshape(B, D1, J, T)


def embed_reference(x, params):
    """Pure-JAX reference for correctness checking."""
    B, C, J, T = x.shape
    w1, w2 = params["w1"], params["w2"]
    gamma, beta = params["gamma"], params["beta"]
    rmean, rvar = params["rmean"], params["rvar"]
    xb = x.reshape(B, C * J, T)
    xn = ((xb - rmean[None, :, None]) / jnp.sqrt(rvar + BN_EPS)[None, :, None]
          * gamma[None, :, None] + beta[None, :, None])
    xn = xn.reshape(B, C, J, T)
    h = jnp.maximum(jnp.einsum("bcjt,ck->bkjt", xn, w1), 0.0)
    o = jnp.maximum(jnp.einsum("bkjt,kd->bdjt", h, w2), 0.0)
    return o


def init_params(key, dim=3, dim1=128):
    k1, k2, k3, k4, k5, k6 = jax.random.split(key, 6)
    cj = dim * NUM_JOINTS
    return {
        # Conv2d(dim, 64, 1, bias=False) weight is (64, dim, 1, 1) in torch;
        # stored here transposed as (dim, 64) / (64, dim1).
        "w1": 0.1 * jax.random.normal(k1, (dim, HIDDEN), jnp.float32),
        "w2": 0.1 * jax.random.normal(k2, (HIDDEN, dim1), jnp.float32),
        "gamma": 1.0 + 0.05 * jax.random.normal(k3, (cj,), jnp.float32),
        "beta": 0.05 * jax.random.normal(k4, (cj,), jnp.float32),
        "rmean": 0.1 * jax.random.normal(k5, (cj,), jnp.float32),
        "rvar": 1.0 + 0.1 * jax.nn.softplus(jax.random.normal(k6, (cj,), jnp.float32)),
    }


if __name__ == "__main__":
    key = jax.random.PRNGKey(0)
    kx, kp, kx2 = jax.random.split(key, 3)

    B, C, J, T = 2, 3, NUM_JOINTS, 8   # skeleton input: (batch, coord, joints, frames)
    x = jax.random.normal(kx, (B, C, J, T), jnp.float32)
    params = init_params(kp, dim=C, dim1=128)

    out = jax.block_until_ready(embed_forward(x, params))
    ref = embed_reference(x, params)
    assert out.shape == (B, 128, J, T), out.shape
    assert jnp.allclose(out, ref, atol=1e-4, rtol=1e-4), float(
        jnp.max(jnp.abs(out - ref)))

    # Second case: B==1 with JT not a multiple of the tile — exercises the
    # partial-last-block write masking and the >=2-spatial-steps path.
    x2 = jax.random.normal(kx2, (1, C, J, 12), jnp.float32)
    out2 = jax.block_until_ready(embed_forward(x2, params))
    ref2 = embed_reference(x2, params)
    assert out2.shape == (1, 128, J, 12), out2.shape
    assert jnp.allclose(out2, ref2, atol=1e-4, rtol=1e-4), float(
        jnp.max(jnp.abs(out2 - ref2)))

    print("KERNEL_OK")
</pallas_src>

<mosaic_0001>
module attributes {stable_mosaic.version = 11 : i64} {
  func.func @_embed_kernel(%arg0: i32, %arg1: i32, %arg2: memref<1x3x256xf32, #tpu.memory_space<vmem>>, %arg3: memref<3x256xf32, #tpu.memory_space<vmem>>, %arg4: memref<3x256xf32, #tpu.memory_space<vmem>>, %arg5: memref<64x3xf32, #tpu.memory_space<vmem>>, %arg6: memref<128x64xf32, #tpu.memory_space<vmem>>, %arg7: memref<1x128x256xf32, #tpu.memory_space<vmem>>) attributes {dimension_semantics = [#tpu.dimension_semantics<parallel>, #tpu.dimension_semantics<parallel>], iteration_bounds = array<i64: 1, 2>, scalar_prefetch = 0 : i64, scratch_operands = 0 : i64, tpu.core_type = #tpu.core_type<tc>, window_params = [{transform_indices = @transform_0, window_bounds = array<i64: 1, 3, 256>}, {transform_indices = @transform_1, window_bounds = array<i64: 3, 256>}, {transform_indices = @transform_2, window_bounds = array<i64: 3, 256>}, {pipeline_mode = #tpu.pipeline_mode<synchronous>, transform_indices = @transform_3, window_bounds = array<i64: 64, 3>}, {pipeline_mode = #tpu.pipeline_mode<synchronous>, transform_indices = @transform_4, window_bounds = array<i64: 128, 64>}, {transform_indices = @transform_5, window_bounds = array<i64: 1, 128, 256>}]} {
    %c0 = arith.constant 0 : index
    %c0_0 = arith.constant 0 : index
    %c0_1 = arith.constant 0 : index
    %0 = vector.load %arg2[%c0, %c0_0, %c0_1] : memref<1x3x256xf32, #tpu.memory_space<vmem>>, vector<1x3x256xf32>
    %1 = vector.shape_cast %0 : vector<1x3x256xf32> to vector<3x256xf32>
    %c0_2 = arith.constant 0 : index
    %c0_3 = arith.constant 0 : index
    %2 = vector.load %arg3[%c0_2, %c0_3] : memref<3x256xf32, #tpu.memory_space<vmem>>, vector<3x256xf32>
    %3 = arith.mulf %1, %2 : vector<3x256xf32>
    %c0_4 = arith.constant 0 : index
    %c0_5 = arith.constant 0 : index
    %4 = vector.load %arg4[%c0_4, %c0_5] : memref<3x256xf32, #tpu.memory_space<vmem>>, vector<3x256xf32>
    %5 = arith.addf %3, %4 : vector<3x256xf32>
    %c0_6 = arith.constant 0 : index
    %c0_7 = arith.constant 0 : index
    %6 = vector.load %arg5[%c0_6, %c0_7] : memref<64x3xf32, #tpu.memory_space<vmem>>, vector<64x3xf32>
    %7 = vector.extract_strided_slice %6 {offsets = [0, 0], sizes = [64, 1], strides = [1, 1]} : vector<64x3xf32> to vector<64x1xf32>
    %8 = vector.extract_strided_slice %5 {offsets = [0, 0], sizes = [1, 256], strides = [1, 1]} : vector<3x256xf32> to vector<1x256xf32>
    %9 = vector.broadcast %7 : vector<64x1xf32> to vector<64x256xf32>
    %10 = vector.broadcast %8 : vector<1x256xf32> to vector<64x256xf32>
    %11 = arith.mulf %9, %10 : vector<64x256xf32>
    %12 = vector.extract_strided_slice %6 {offsets = [0, 1], sizes = [64, 1], strides = [1, 1]} : vector<64x3xf32> to vector<64x1xf32>
    %13 = vector.extract_strided_slice %5 {offsets = [1, 0], sizes = [1, 256], strides = [1, 1]} : vector<3x256xf32> to vector<1x256xf32>
    %14 = vector.broadcast %12 : vector<64x1xf32> to vector<64x256xf32>
    %15 = vector.broadcast %13 : vector<1x256xf32> to vector<64x256xf32>
    %16 = arith.mulf %14, %15 : vector<64x256xf32>
    %17 = arith.addf %11, %16 : vector<64x256xf32>
    %18 = vector.extract_strided_slice %6 {offsets = [0, 2], sizes = [64, 1], strides = [1, 1]} : vector<64x3xf32> to vector<64x1xf32>
    %19 = vector.extract_strided_slice %5 {offsets = [2, 0], sizes = [1, 256], strides = [1, 1]} : vector<3x256xf32> to vector<1x256xf32>
    %20 = vector.broadcast %18 : vector<64x1xf32> to vector<64x256xf32>
    %21 = vector.broadcast %19 : vector<1x256xf32> to vector<64x256xf32>
    %22 = arith.mulf %20, %21 : vector<64x256xf32>
    %23 = arith.addf %17, %22 : vector<64x256xf32>
    %cst = arith.constant 0.000000e+00 : f32
    %24 = vector.broadcast %cst : f32 to vector<64x256xf32>
    %25 = arith.maximumf %23, %24 : vector<64x256xf32>
    %c0_8 = arith.constant 0 : index
    %c0_9 = arith.constant 0 : index
    %26 = vector.load %arg6[%c0_8, %c0_9] : memref<128x64xf32, #tpu.memory_space<vmem>>, vector<128x64xf32>
    %cst_10 = arith.constant dense<0.000000e+00> : vector<128x256xf32>
    %27 = tpu.matmul %26, %25, %cst_10 {dimension_numbers = #tpu.dot_dimension_numbers<[1], [0], [0], [1], [0, 0, 1, 1], [], []>} : vector<128x64xf32>, vector<64x256xf32>, vector<128x256xf32> -> vector<128x256xf32>
    %cst_11 = arith.constant 0.000000e+00 : f32
    %28 = vector.broadcast %cst_11 : f32 to vector<128x256xf32>
    %29 = arith.maximumf %27, %28 : vector<128x256xf32>
    %c0_12 = arith.constant 0 : index
    %c0_13 = arith.constant 0 : index
    %c0_14 = arith.constant 0 : index
    %30 = vector.load %arg7[%c0_12, %c0_13, %c0_14] : memref<1x128x256xf32, #tpu.memory_space<vmem>>, vector<1x128x256xf32>
    %31 = vector.shape_cast %30 : vector<1x128x256xf32> to vector<128x256xf32>
    %32 = vector.shape_cast %29 : vector<128x256xf32> to vector<1x128x256xf32>
    tpu.vector_store %arg7[%c0_12, %c0_13, %c0_14], %32 {strides = array<i32>} : memref<1x128x256xf32, #tpu.memory_space<vmem>>, vector<1x128x256xf32>,
    return
  }
  func.func @transform_0(%arg0: i32, %arg1: i32) -> (i32, i32, i32) {
    %c0_i32 = arith.constant 0 : i32
    %c0_i32_0 = arith.constant 0 : i32
    return %arg1, %c0_i32, %arg0 : i32, i32, i32
  }
  func.func @transform_1(%arg0: i32, %arg1: i32) -> (i32, i32) {
    %c0_i32 = arith.constant 0 : i32
    %c0_i32_0 = arith.constant 0 : i32
    return %c0_i32, %arg0 : i32, i32
  }
  func.func @transform_2(%arg0: i32, %arg1: i32) -> (i32, i32) {
    %c0_i32 = arith.constant 0 : i32
    %c0_i32_0 = arith.constant 0 : i32
    return %c0_i32, %arg0 : i32, i32
  }
  func.func @transform_3(%arg0: i32, %arg1: i32) -> (i32, i32) {
    %c0_i32 = arith.constant 0 : i32
    %c0_i32_0 = arith.constant 0 : i32
    %c0_i32_1 = arith.constant 0 : i32
    return %c0_i32, %c0_i32_0 : i32, i32
  }
  func.func @transform_4(%arg0: i32, %arg1: i32) -> (i32, i32) {
    %c0_i32 = arith.constant 0 : i32
    %c0_i32_0 = arith.constant 0 : i32
    %c0_i32_1 = arith.constant 0 : i32
    return %c0_i32, %c0_i32_0 : i32, i32
  }
  func.func @transform_5(%arg0: i32, %arg1: i32) -> (i32, i32, i32) {
    %c0_i32 = arith.constant 0 : i32
    %c0_i32_0 = arith.constant 0 : i32
    return %arg1, %c0_i32, %arg0 : i32, i32, i32
  }
}

</mosaic_0001>

<llo_original>
// kernel: tpu_custom_call.1
$region0: #{tpu_custom_call.1}
  #allocation0 [shape = 'u32[]', space=smem, size = 0x4, offset = 0x4, fixed_abs, tag = 'smem constant byte address 0x4 - core index']
  #allocation1 [shape = 'u32[144,128]{1,0:T(1,128)}', space=vmem, size = 0x12000, scoped, tag = 'internal scratch']
  %s0 = inlined_call_operand.vmem [shape: f32[2,3,200], index: 0, kind: input, shape index: {}]
  %s1 = inlined_call_operand.vmem [shape: f32[3,200], index: 1, kind: input, shape index: {}]
  %s2 = inlined_call_operand.vmem [shape: f32[3,200], index: 2, kind: input, shape index: {}]
  %s3 = inlined_call_operand.vmem [shape: f32[64,3], index: 3, kind: input, shape index: {}]
  %s4 = inlined_call_operand.vmem [shape: f32[128,64], index: 4, kind: input, shape index: {}]
  %s5 = inlined_call_operand.vmem [shape: f32[2,128,200], index: 5, kind: output, shape index: {}]
  %s6 = sld [smem:[#allocation0]]
  $region53: #{tpu_custom_call.1} parent=0
    _
  %s8 = ssub.s32 1, %s6
  %s9 = scalar_select 0, %s8, %s6
  loop: start=0, step=1, limit=4
  $region2: #{tpu_custom_call.1} parent=0 // loop_pre_header
    _
  $region3: #{tpu_custom_call.1} parent=0 // loop_header
    %s11 = sphi 0, %s15
    %p12 = scmp.ge.s32.totalorder %s11, 4
    %s18 = sphi 0, %s30
    %s19 = sphi 0, %s26
    %s20 = sphi 0, %s18
    %s21 = sphi 0, %s19
    %s22 = sphi 0, %s20
    %s23 = sphi 0, %s21
    %s35 = sphi 0, %s37
    %s38 = sphi 0, %s35
    %s39 = sphi 0, %s38
    %s55 = sphi 0, %s39
    %s61 = sphi 0, %s63
    %s64 = sphi 0, %s61
    %s65 = sphi 0, %s64
    %s81 = sphi 0, %s65
    %s87 = sphi 0, %s89
    %s90 = sphi 0, %s87
    %s91 = sphi 0, %s90
    %s107 = sphi 0, %s91
    %s111 = sphi 0, %s111
    %s113 = sphi 0, %s111
    %s114 = sphi 0, %s113
    %s128 = sphi 0, %s114
    %s132 = sphi 0, %s132
    %s134 = sphi 0, %s132
    %s135 = sphi 0, %s134
    %s149 = sphi 0, %s135
    %s157 = sphi 0, %s159
    %s160 = sphi 0, %s157
    %s161 = sphi 0, %s160
    %s177 = sphi 0, %s161
  $region4: #{tpu_custom_call.1} parent=0 // loop_header_branch
    %14 = sbr.rel (%p12) target = $region8
  $region5: #{tpu_custom_call.1} parent=0 // loop_body
    %s16 = ssub.s32 %s11, 1
    %s17 = ssub.s32 %s11, 2
    %s24 = sadd.s32 1, %s19
    %p25 = scmp.ge.s32.totalorder %s24, 2
    %s26 = scalar_select %p25, 0, %s24
    %s27 = sadd.s32 1, %s18
    %s28 = scalar_select %p25, %s27, %s18
    %p29 = scmp.ge.s32.totalorder %s28, 1
    %s30 = scalar_select %p29, 0, %s28
    %s31 = ssub.s32 %s19, %s26
    %s32 = ssub.s32 %s18, %s30
    %s33 = sor.u32 %s31, %s32
    %p34 = scmp.eq.s32.totalorder %s33, 0
    %s36 = sadd.s32 %s35, 1
    %s37 = scalar_select %p34, %s35, %s36
    %p40 = pneg %p34
    %p41 = scmp.eq.s32.totalorder %s11, 1
    %p42 = por %p40, %p41
    %p43 = scmp.ne.s32.totalorder %s35, %s38
    %p44 = scmp.eq.s32.totalorder %s11, 0
    %p45 = por %p43, %p44
    %p46 = scmp.ne.s32.totalorder %s35, %s38
    %p47 = scmp.eq.s32.totalorder %s16, 1
    %p48 = por %p46, %p47
    %p49 = scmp.ne.s32.totalorder %s38, %s39
    %p50 = scmp.eq.s32.totalorder %s16, 0
    %p51 = por %p49, %p50
    %p52 = scmp.ne.s32.totalorder %s38, %s39
    %p53 = scmp.eq.s32.totalorder %s17, 1
    %p54 = por %p52, %p53
    %p56 = scmp.ne.s32.totalorder %s39, %s55
    %p57 = scmp.eq.s32.totalorder %s17, 0
    %p58 = por %p56, %p57
    %s59 = ssub.s32 %s18, %s30
    %p60 = scmp.eq.s32.totalorder %s59, 0
    %s62 = sadd.s32 %s61, 1
    %s63 = scalar_select %p60, %s61, %s62
    %p66 = pneg %p60
    %p67 = scmp.eq.s32.totalorder %s11, 1
    %p68 = por %p66, %p67
    %p69 = scmp.ne.s32.totalorder %s61, %s64
    %p70 = scmp.eq.s32.totalorder %s11, 0
    %p71 = por %p69, %p70
    %p72 = scmp.ne.s32.totalorder %s61, %s64
    %p73 = scmp.eq.s32.totalorder %s16, 1
    %p74 = por %p72, %p73
    %p75 = scmp.ne.s32.totalorder %s64, %s65
    %p76 = scmp.eq.s32.totalorder %s16, 0
    %p77 = por %p75, %p76
    %p78 = scmp.ne.s32.totalorder %s64, %s65
    %p79 = scmp.eq.s32.totalorder %s17, 1
    %p80 = por %p78, %p79
    %p82 = scmp.ne.s32.totalorder %s65, %s81
    %p83 = scmp.eq.s32.totalorder %s17, 0
    %p84 = por %p82, %p83
    %s85 = ssub.s32 %s18, %s30
    %p86 = scmp.eq.s32.totalorder %s85, 0
    %s88 = sadd.s32 %s87, 1
    %s89 = scalar_select %p86, %s87, %s88
    %p92 = pneg %p86
    %p93 = scmp.eq.s32.totalorder %s11, 1
    %p94 = por %p92, %p93
    %p95 = scmp.ne.s32.totalorder %s87, %s90
    %p96 = scmp.eq.s32.totalorder %s11, 0
    %p97 = por %p95, %p96
    %p98 = scmp.ne.s32.totalorder %s87, %s90
    %p99 = scmp.eq.s32.totalorder %s16, 1
    %p100 = por %p98, %p99
    %p101 = scmp.ne.s32.totalorder %s90, %s91
    %p102 = scmp.eq.s32.totalorder %s16, 0
    %p103 = por %p101, %p102
    %p104 = scmp.ne.s32.totalorder %s90, %s91
    %p105 = scmp.eq.s32.totalorder %s17, 1
    %p106 = por %p104, %p105
    %p108 = scmp.ne.s32.totalorder %s91, %s107
    %p109 = scmp.eq.s32.totalorder %s17, 0
    %p110 = por %p108, %p109
    %s112 = sadd.s32 %s111, 1
    %p115 = scmp.eq.s32.totalorder %s11, 1
    %p116 = scmp.ne.s32.totalorder %s111, %s113
    %p117 = scmp.eq.s32.totalorder %s11, 0
    %p118 = por %p116, %p117
    %p119 = scmp.ne.s32.totalorder %s111, %s113
    %p120 = scmp.eq.s32.totalorder %s16, 1
    %p121 = por %p119, %p120
    %p122 = scmp.ne.s32.totalorder %s113, %s114
    %p123 = scmp.eq.s32.totalorder %s16, 0
    %p124 = por %p122, %p123
    %p125 = scmp.ne.s32.totalorder %s113, %s114
    %p126 = scmp.eq.s32.totalorder %s17, 1
    %p127 = por %p125, %p126
    %p129 = scmp.ne.s32.totalorder %s114, %s128
    %p130 = scmp.eq.s32.totalorder %s17, 0
    %p131 = por %p129, %p130
    %s133 = sadd.s32 %s132, 1
    %p136 = scmp.eq.s32.totalorder %s11, 1
    %p137 = scmp.ne.s32.totalorder %s132, %s134
    %p138 = scmp.eq.s32.totalorder %s11, 0
    %p139 = por %p137, %p138
    %p140 = scmp.ne.s32.totalorder %s132, %s134
    %p141 = scmp.eq.s32.totalorder %s16, 1
    %p142 = por %p140, %p141
    %p143 = scmp.ne.s32.totalorder %s134, %s135
    %p144 = scmp.eq.s32.totalorder %s16, 0
    %p145 = por %p143, %p144
    %p146 = scmp.ne.s32.totalorder %s134, %s135
    %p147 = scmp.eq.s32.totalorder %s17, 1
    %p148 = por %p146, %p147
    %p150 = scmp.ne.s32.totalorder %s135, %s149
    %p151 = scmp.eq.s32.totalorder %s17, 0
    %p152 = por %p150, %p151
    %s153 = ssub.s32 %s19, %s26
    %s154 = ssub.s32 %s18, %s30
    %s155 = sor.u32 %s153, %s154
    %p156 = scmp.eq.s32.totalorder %s155, 0
    %s158 = sadd.s32 %s157, 1
    %s159 = scalar_select %p156, %s157, %s158
    %p162 = pneg %p156
    %p163 = scmp.eq.s32.totalorder %s11, 1
    %p164 = por %p162, %p163
    %p165 = scmp.ne.s32.totalorder %s157, %s160
    %p166 = scmp.eq.s32.totalorder %s11, 0
    %p167 = por %p165, %p166
    %p168 = scmp.ne.s32.totalorder %s157, %s160
    %p169 = scmp.eq.s32.totalorder %s16, 1
    %p170 = por %p168, %p169
    %p171 = scmp.ne.s32.totalorder %s160, %s161
    %p172 = scmp.eq.s32.totalorder %s16, 0
    %p173 = por %p171, %p172
    %p174 = scmp.ne.s32.totalorder %s160, %s161
    %p175 = scmp.eq.s32.totalorder %s17, 1
    %p176 = por %p174, %p175
    %p178 = scmp.ne.s32.totalorder %s161, %s177
    %p179 = scmp.eq.s32.totalorder %s17, 0
    %p180 = por %p178, %p179
    %p181 = scmp.le.s32.totalorder 1, %s11
    %p182 = scmp.lt.s32.totalorder %s11, 3
    %p183 = pnand %p181, %p182
    %p184 = pneg %p183
    // Predicated region
    $region9: #{tpu_custom_call.1} parent=5 // pred_check
      _
    $region10: #{tpu_custom_call.1} parent=5 // pred_check_branch
      %186 = sbr.rel (%p183) target = $region12
    $region11: #{tpu_custom_call.1} parent=5 // pred_region
      %s187 = ssub.s32 %s11, 1
      // Predicated region
      $region13: #{tpu_custom_call.1} parent=11 // pred_check
        %p188 = pneg %p77
      $region14: #{tpu_custom_call.1} parent=11 // pred_check_branch
        %190 = sbr.rel (%p188) target = $region16
      $region15: #{tpu_custom_call.1} parent=11 // pred_region
        %s191 = smul.u32 2, %s20
        %p192 = scmp.lt.s32.totalorder %s191, 1
        %s193 = scalar_select %p192, %s191, 1
        %s194 = smul.addr %s193, 4
        %s195 = scalar_lea.vmem %s1, %s194
        %s196 = smul.u32 2, %s20
      $region16: #{tpu_custom_call.1} parent=11 // pred_fallthru
        _
      // Predicated region
      $region17: #{tpu_custom_call.1} parent=11 // pred_check
        %p197 = pneg %p103
      $region18: #{tpu_custom_call.1} parent=11 // pred_check_branch
        %199 = sbr.rel (%p197) target = $region20
      $region19: #{tpu_custom_call.1} parent=11 // pred_region
        %s200 = smul.u32 2, %s20
        %p201 = scmp.lt.s32.totalorder %s200, 1
        %s202 = scalar_select %p201, %s200, 1
        %s203 = smul.addr %s202, 4
        %s204 = scalar_lea.vmem %s2, %s203
        %s205 = smul.u32 2, %s20
      $region20: #{tpu_custom_call.1} parent=11 // pred_fallthru
        _
      // Predicated region
      $region21: #{tpu_custom_call.1} parent=11 // pred_check
        %p206 = pneg %p124
      $region22: #{tpu_custom_call.1} parent=11 // pred_check_branch
        %208 = sbr.rel (%p206) target = $region24
      $region23: #{tpu_custom_call.1} parent=11 // pred_region
        _
      $region24: #{tpu_custom_call.1} parent=11 // pred_fallthru
        _
      // Predicated region
      $region25: #{tpu_custom_call.1} parent=11 // pred_check
        %p209 = pneg %p145
      $region26: #{tpu_custom_call.1} parent=11 // pred_check_branch
        %211 = sbr.rel (%p209) target = $region28
      $region27: #{tpu_custom_call.1} parent=11 // pred_region
        _
      $region28: #{tpu_custom_call.1} parent=11 // pred_fallthru
        _
    $region12: #{tpu_custom_call.1} parent=5 // pred_fallthru
      _
    %p212 = scmp.lt.s32.totalorder %s11, 2
    // Predicated region
    $region29: #{tpu_custom_call.1} parent=5 // pred_check
      %p213 = pneg %p212
    $region30: #{tpu_custom_call.1} parent=5 // pred_check_branch
      %215 = sbr.rel (%p213) target = $region32
    $region31: #{tpu_custom_call.1} parent=5 // pred_region
      // Predicated region
      $region33: #{tpu_custom_call.1} parent=31 // pred_check
        %p216 = pneg %p45
      $region34: #{tpu_custom_call.1} parent=31 // pred_check_branch
        %218 = sbr.rel (%p216) target = $region36
      $region35: #{tpu_custom_call.1} parent=31 // pred_region
        %s219 = smul.u32 2, %s18
        %p220 = scmp.lt.s32.totalorder %s19, 1
        %s221 = scalar_select %p220, %s19, 1
        %p222 = scmp.lt.s32.totalorder %s219, 1
        %s223 = scalar_select %p222, %s219, 1
        %s224 = smul.addr %s221, 2
        %s225 = sadd.s32 %s223, %s224
        %s226 = smul.addr %s225, 4
        %s227 = scalar_lea.vmem %s0, %s226
        %s228 = smul.u32 2, %s18
      $region36: #{tpu_custom_call.1} parent=31 // pred_fallthru
        _
    $region32: #{tpu_custom_call.1} parent=5 // pred_fallthru
      _
    %p229 = scmp.le.s32.totalorder 1, %s11
    %p230 = scmp.lt.s32.totalorder %s11, 3
    %p231 = pnand %p229, %p230
    %p232 = pneg %p231
    // Predicated region
    $region37: #{tpu_custom_call.1} parent=5 // pred_check
      _
    $region38: #{tpu_custom_call.1} parent=5 // pred_check_branch
      %234 = sbr.rel (%p231) target = $region40
    $region39: #{tpu_custom_call.1} parent=5 // pred_region
      %s235 = ssub.s32 %s11, 1
      %s236 = smul.u32 2, %s20
      %p237 = scmp.lt.s32.totalorder %s21, 1
      %s238 = scalar_select %p237, %s21, 1
      %p239 = scmp.lt.s32.totalorder %s236, 1
      %s240 = scalar_select %p239, %s236, 1
      %s241 = smul.addr %s238, 2
      %s242 = sadd.s32 %s240, %s241
      %s243 = smul.addr %s242, 4
      %s244 = scalar_lea.vmem %s0, %s243
      %p245 = pneg %p51
      %p246 = pneg %p48
      %s247 = smul.u32 2, %s20
      %p248 = scmp.lt.s32.totalorder %s247, 1
      %s249 = scalar_select %p248, %s247, 1
      %s250 = smul.addr %s249, 4
      %s251 = scalar_lea.vmem %s1, %s250
      %p252 = pneg %p77
      %p253 = pneg %p74
      %s254 = smul.u32 2, %s20
      %p255 = scmp.lt.s32.totalorder %s254, 1
      %s256 = scalar_select %p255, %s254, 1
      %s257 = smul.addr %s256, 4
      %s258 = scalar_lea.vmem %s2, %s257
      %p259 = pneg %p103
      %p260 = pneg %p100
      %p261 = pneg %p124
      %p262 = pneg %p121
      %p263 = pneg %p145
      %p264 = pneg %p142
      %p265 = pneg %p173
      %p266 = pneg %p170
      %s267 = smul.u32 2, %s20
      %p268 = scmp.lt.s32.totalorder %s21, 1
      %s269 = scalar_select %p268, %s21, 1
      %p270 = scmp.lt.s32.totalorder %s267, 1
      %s271 = scalar_select %p270, %s267, 1
      %s272 = smul.addr %s269, 32
      %s273 = sadd.s32 %s271, %s272
      %s274 = smul.addr %s273, 8
      %s275 = scalar_lea.vmem %s5, %s274
      %s276 = smul.u32 2, %s20
      %p277 = scmp.lt.s32.totalorder %s21, 1
      %s278 = scalar_select %p277, %s21, 1
      %p279 = scmp.lt.s32.totalorder %s276, 1
      %s280 = scalar_select %p279, %s276, 1
      %s281 = smul.addr %s278, 2
      %s282 = sadd.s32 %s280, %s281
      %s283 = smul.addr %s282, 4
      %s284 = scalar_lea.vmem %s0, %s283
      %s285 = smul.u32 2, %s20
      %s286 = smul.u32 2, %s20
      %p287 = scmp.lt.s32.totalorder %s286, 1
      %s288 = scalar_select %p287, %s286, 1
      %s289 = smul.addr %s288, 4
      %s290 = scalar_lea.vmem %s1, %s289
      %s291 = smul.u32 2, %s20
      %s292 = smul.u32 2, %s20
      %p293 = scmp.lt.s32.totalorder %s292, 1
      %s294 = scalar_select %p293, %s292, 1
      %s295 = smul.addr %s294, 4
      %s296 = scalar_lea.vmem %s2, %s295
      %s297 = smul.u32 2, %s20
      %s298 = smul.u32 2, %s20
      %p299 = scmp.lt.s32.totalorder %s21, 1
      %s300 = scalar_select %p299, %s21, 1
      %p301 = scmp.lt.s32.totalorder %s298, 1
      %s302 = scalar_select %p301, %s298, 1
      %s303 = smul.addr %s300, 32
      %s304 = sadd.s32 %s302, %s303
      %s305 = smul.addr %s304, 8
      %s306 = scalar_lea.vmem %s5, %s305
      %s307 = smul.u32 2, %s20
      %v308 = vld [vmem:[%s284] sm:$0x77]
      %v309 = vld [vmem:[%s290] sm:$0x77]
      %v310 = vmul.f32 %v308, %v309
      %v311 = vld [vmem:[%s296] sm:$0x77]
      %v312 = vadd.f32 %v310, %v311
      %v313 = vld [vmem:[%s3] sm:$0xff]
      %v314 = vld [vmem:[%s3 + $0x8] sm:$0xff]
      %v315 = vld [vmem:[%s3 + $0x10] sm:$0xff]
      %v316 = vld [vmem:[%s3 + $0x18] sm:$0xff]
      %v317 = vld [vmem:[%s3 + $0x20] sm:$0xff]
      %v318 = vld [vmem:[%s3 + $0x28] sm:$0xff]
      %v319 = vld [vmem:[%s3 + $0x30] sm:$0xff]
      %v320 = vld [vmem:[%s3 + $0x38] sm:$0xff]
      %322 = vset.pattern.permute.xlu0 0
      %323 = vperm.xlu0 %322, %v313
      %v324 = vpop.permute.xlu0 %323
      %327 = vset.pattern.permute.xlu0 0
      %328 = vperm.xlu0 %327, %v314
      %v329 = vpop.permute.xlu0 %328
      %332 = vset.pattern.permute.xlu0 0
      %333 = vperm.xlu0 %332, %v315
      %v334 = vpop.permute.xlu0 %333
      %337 = vset.pattern.permute.xlu0 0
      %338 = vperm.xlu0 %337, %v316
      %v339 = vpop.permute.xlu0 %338
      %342 = vset.pattern.permute.xlu0 0
      %343 = vperm.xlu0 %342, %v317
      %v344 = vpop.permute.xlu0 %343
      %347 = vset.pattern.permute.xlu0 0
      %348 = vperm.xlu0 %347, %v318
      %v349 = vpop.permute.xlu0 %348
      %352 = vset.pattern.permute.xlu0 0
      %353 = vperm.xlu0 %352, %v319
      %v354 = vpop.permute.xlu0 %353
      %357 = vset.pattern.permute.xlu0 0
      %358 = vperm.xlu0 %357, %v320
      %v359 = vpop.permute.xlu0 %358
      %v362 = vlaneseq
      %v363 = vshrl.u32 %v362, 7
      %v364 = vsub.s32 0, %v363
      %v365 = vrot.slane %v312, %v364
      %v366 = vlaneseq
      %v367 = vshrl.u32 %v366, 7
      %v368 = vsub.s32 4, %v367
      %v369 = vrot.slane %v312, %v368
      %v372 = vlaneseq
      %v373 = vshrl.u32 %v372, 7
      %v374 = vsub.s32 0, %v373
      %v375 = vrot.slane %v365, %v374
      %v376 = vlaneseq
      %v377 = vshrl.u32 %v376, 7
      %v378 = vsub.s32 0, %v377
      %v379 = vrot.slane %v369, %v378
      %v380 = vmul.f32 %v324, %v375
      %v381 = vmul.f32 %v324, %v379
      %v382 = vmul.f32 %v329, %v375
      %v383 = vmul.f32 %v329, %v379
      %v384 = vmul.f32 %v334, %v375
      %v385 = vmul.f32 %v334, %v379
      %v386 = vmul.f32 %v339, %v375
      %v387 = vmul.f32 %v339, %v379
      %v388 = vmul.f32 %v344, %v375
      %v389 = vmul.f32 %v344, %v379
      %v390 = vmul.f32 %v349, %v375
      %v391 = vmul.f32 %v349, %v379
      %v392 = vmul.f32 %v354, %v375
      %v393 = vmul.f32 %v354, %v379
      %v394 = vmul.f32 %v359, %v375
      %v395 = vmul.f32 %v359, %v379
      %396 = vset.pattern.permute.xlu0 1
      %397 = vperm.xlu0 %396, %v313
      %v398 = vpop.permute.xlu0 %397
      %400 = vset.pattern.permute.xlu0 1
      %401 = vperm.xlu0 %400, %v314
      %v402 = vpop.permute.xlu0 %401
      %404 = vset.pattern.permute.xlu0 1
      %405 = vperm.xlu0 %404, %v315
      %v406 = vpop.permute.xlu0 %405
      %408 = vset.pattern.permute.xlu0 1
      %409 = vperm.xlu0 %408, %v316
      %v410 = vpop.permute.xlu0 %409
      %412 = vset.pattern.permute.xlu0 1
      %413 = vperm.xlu0 %412, %v317
      %v414 = vpop.permute.xlu0 %413
      %416 = vset.pattern.permute.xlu0 1
      %417 = vperm.xlu0 %416, %v318
      %v418 = vpop.permute.xlu0 %417
      %420 = vset.pattern.permute.xlu0 1
      %421 = vperm.xlu0 %420, %v319
      %v422 = vpop.permute.xlu0 %421
      %424 = vset.pattern.permute.xlu0 1
      %425 = vperm.xlu0 %424, %v320
      %v426 = vpop.permute.xlu0 %425
      %v428 = vlaneseq
      %v429 = vshrl.u32 %v428, 7
      %v430 = vsub.s32 1, %v429
      %v431 = vrot.slane %v312, %v430
      %v432 = vlaneseq
      %v433 = vshrl.u32 %v432, 7
      %v434 = vsub.s32 5, %v433
      %v435 = vrot.slane %v312, %v434
      %v438 = vlaneseq
      %v439 = vshrl.u32 %v438, 7
      %v440 = vsub.s32 1, %v439
      %v441 = vrot.slane %v431, %v440
      %v442 = vlaneseq
      %v443 = vshrl.u32 %v442, 7
      %v444 = vsub.s32 1, %v443
      %v445 = vrot.slane %v435, %v444
      %v446 = vmul.f32 %v398, %v441
      %v447 = vmul.f32 %v398, %v445
      %v448 = vmul.f32 %v402, %v441
      %v449 = vmul.f32 %v402, %v445
      %v450 = vmul.f32 %v406, %v441
      %v451 = vmul.f32 %v406, %v445
      %v452 = vmul.f32 %v410, %v441
      %v453 = vmul.f32 %v410, %v445
      %v454 = vmul.f32 %v414, %v441
      %v455 = vmul.f32 %v414, %v445
      %v456 = vmul.f32 %v418, %v441
      %v457 = vmul.f32 %v418, %v445
      %v458 = vmul.f32 %v422, %v441
      %v459 = vmul.f32 %v422, %v445
      %v460 = vmul.f32 %v426, %v441
      %v461 = vmul.f32 %v426, %v445
      %v462 = vadd.f32 %v380, %v446
      %v463 = vadd.f32 %v381, %v447
      %v464 = vadd.f32 %v382, %v448
      %v465 = vadd.f32 %v383, %v449
      %v466 = vadd.f32 %v384, %v450
      %v467 = vadd.f32 %v385, %v451
      %v468 = vadd.f32 %v386, %v452
      %v469 = vadd.f32 %v387, %v453
      %v470 = vadd.f32 %v388, %v454
      %v471 = vadd.f32 %v389, %v455
      %v472 = vadd.f32 %v390, %v456
      %v473 = vadd.f32 %v391, %v457
      %v474 = vadd.f32 %v392, %v458
      %v475 = vadd.f32 %v393, %v459
      %v476 = vadd.f32 %v394, %v460
      %v477 = vadd.f32 %v395, %v461
      %478 = vset.pattern.permute.xlu0 2
      %479 = vperm.xlu0 %478, %v313
      %v480 = vpop.permute.xlu0 %479
      %482 = vset.pattern.permute.xlu0 2
      %483 = vperm.xlu0 %482, %v314
      %v484 = vpop.permute.xlu0 %483
      %486 = vset.pattern.permute.xlu0 2
      %487 = vperm.xlu0 %486, %v315
      %v488 = vpop.permute.xlu0 %487
      %490 = vset.pattern.permute.xlu0 2
      %491 = vperm.xlu0 %490, %v316
      %v492 = vpop.permute.xlu0 %491
      %494 = vset.pattern.permute.xlu0 2
      %495 = vperm.xlu0 %494, %v317
      %v496 = vpop.permute.xlu0 %495
      %498 = vset.pattern.permute.xlu0 2
      %499 = vperm.xlu0 %498, %v318
      %v500 = vpop.permute.xlu0 %499
      %502 = vset.pattern.permute.xlu0 2
      %503 = vperm.xlu0 %502, %v319
      %v504 = vpop.permute.xlu0 %503
      %506 = vset.pattern.permute.xlu0 2
      %507 = vperm.xlu0 %506, %v320
      %v508 = vpop.permute.xlu0 %507
      %v510 = vlaneseq
      %v511 = vshrl.u32 %v510, 7
      %v512 = vsub.s32 2, %v511
      %v513 = vrot.slane %v312, %v512
      %v514 = vlaneseq
      %v515 = vshrl.u32 %v514, 7
      %v516 = vsub.s32 6, %v515
      %v517 = vrot.slane %v312, %v516
      %v520 = vlaneseq
      %v521 = vshrl.u32 %v520, 7
      %v522 = vsub.s32 2, %v521
      %v523 = vrot.slane %v513, %v522
      %v524 = vlaneseq
      %v525 = vshrl.u32 %v524, 7
      %v526 = vsub.s32 2, %v525
      %v527 = vrot.slane %v517, %v526
      %v528 = vmul.f32 %v480, %v523
      %v529 = vmul.f32 %v480, %v527
      %v530 = vmul.f32 %v484, %v523
      %v531 = vmul.f32 %v484, %v527
      %v532 = vmul.f32 %v488, %v523
      %v533 = vmul.f32 %v488, %v527
      %v534 = vmul.f32 %v492, %v523
      %v535 = vmul.f32 %v492, %v527
      %v536 = vmul.f32 %v496, %v523
      %v537 = vmul.f32 %v496, %v527
      %v538 = vmul.f32 %v500, %v523
      %v539 = vmul.f32 %v500, %v527
      %v540 = vmul.f32 %v504, %v523
      %v541 = vmul.f32 %v504, %v527
      %v542 = vmul.f32 %v508, %v523
      %v543 = vmul.f32 %v508, %v527
      %v544 = vadd.f32 %v462, %v528
      %v545 = vadd.f32 %v463, %v529
      %v546 = vadd.f32 %v464, %v530
      %v547 = vadd.f32 %v465, %v531
      %v548 = vadd.f32 %v466, %v532
      %v549 = vadd.f32 %v467, %v533
      %v550 = vadd.f32 %v468, %v534
      %v551 = vadd.f32 %v469, %v535
      %v552 = vadd.f32 %v470, %v536
      %v553 = vadd.f32 %v471, %v537
      %v554 = vadd.f32 %v472, %v538
      %v555 = vadd.f32 %v473, %v539
      %v556 = vadd.f32 %v474, %v540
      %v557 = vadd.f32 %v475, %v541
      %v558 = vadd.f32 %v476, %v542
      %v559 = vadd.f32 %v477, %v543
      %v560 = vmax.f32 %v544, 0.0
      %v561 = vmax.f32 %v545, 0.0
      %v562 = vmax.f32 %v546, 0.0
      %v563 = vmax.f32 %v547, 0.0
      %v564 = vmax.f32 %v548, 0.0
      %v565 = vmax.f32 %v549, 0.0
      %v566 = vmax.f32 %v550, 0.0
      %v567 = vmax.f32 %v551, 0.0
      %v568 = vmax.f32 %v552, 0.0
      %v569 = vmax.f32 %v553, 0.0
      %v570 = vmax.f32 %v554, 0.0
      %v571 = vmax.f32 %v555, 0.0
      %v572 = vmax.f32 %v556, 0.0
      %v573 = vmax.f32 %v557, 0.0
      %v574 = vmax.f32 %v558, 0.0
      %v575 = vmax.f32 %v559, 0.0
      %v576 = vld [vmem:[%s4] sm:$0xff]
      %v577 = vld [vmem:[%s4 + $0x8] sm:$0xff]
      %v578 = vld [vmem:[%s4 + $0x10] sm:$0xff]
      %v579 = vld [vmem:[%s4 + $0x18] sm:$0xff]
      %v580 = vld [vmem:[%s4 + $0x20] sm:$0xff]
      %v581 = vld [vmem:[%s4 + $0x28] sm:$0xff]
      %v582 = vld [vmem:[%s4 + $0x30] sm:$0xff]
      %v583 = vld [vmem:[%s4 + $0x38] sm:$0xff]
      %v584 = vld [vmem:[%s4 + $0x40] sm:$0xff]
      %v585 = vld [vmem:[%s4 + $0x48] sm:$0xff]
      %v586 = vld [vmem:[%s4 + $0x50] sm:$0xff]
      %v587 = vld [vmem:[%s4 + $0x58] sm:$0xff]
      %v588 = vld [vmem:[%s4 + $0x60] sm:$0xff]
      %v589 = vld [vmem:[%s4 + $0x68] sm:$0xff]
      %v590 = vld [vmem:[%s4 + $0x70] sm:$0xff]
      %v591 = vld [vmem:[%s4 + $0x78] sm:$0xff]
      %vm592 = vcmask 523264
      %v594 = vsel %vm592, %v576, 0
      %v597 = vsel %vm592, %v577, 0
      %v600 = vsel %vm592, %v578, 0
      %v603 = vsel %vm592, %v579, 0
      %v606 = vsel %vm592, %v580, 0
      %v609 = vsel %vm592, %v581, 0
      %v612 = vsel %vm592, %v582, 0
      %v615 = vsel %vm592, %v583, 0
      %v618 = vsel %vm592, %v584, 0
      %v621 = vsel %vm592, %v585, 0
      %v624 = vsel %vm592, %v586, 0
      %v627 = vsel %vm592, %v587, 0
      %v630 = vsel %vm592, %v588, 0
      %v633 = vsel %vm592, %v589, 0
      %v636 = vsel %vm592, %v590, 0
      %v639 = vsel %vm592, %v591, 0
      %641 = vmatprep.subr.mxu0 0.0
      %642 = vmatpush1.msra.mxu0 0.0
      %643 = vmatprep.subr.mxu0 0.0
      %644 = vmatpush1.msra.mxu0 0.0
      %645 = vmatprep.subr.mxu0 0.0
      %646 = vmatpush1.msra.mxu0 0.0
      %647 = vmatprep.subr.mxu0 0.0
      %648 = vmatpush1.msra.mxu0 0.0
      %649 = vmatprep.subr.mxu0 0.0
      %650 = vmatpush1.msra.mxu0 0.0
      %651 = vmatprep.subr.mxu0 0.0
      %652 = vmatpush1.msra.mxu0 0.0
      %653 = vmatprep.subr.mxu0 0.0
      %654 = vmatpush1.msra.mxu0 0.0
      %655 = vmatprep.subr.mxu0 0.0
      %656 = vmatpush1.msra.mxu0 0.0
      %657 = vmatprep.subr.mxu0 %v575
      %658 = vmatpush1.msra.mxu0 %v574
      %659 = vmatprep.subr.mxu0 %v573
      %660 = vmatpush1.msra.mxu0 %v572
      %661 = vmatprep.subr.mxu0 %v571
      %662 = vmatpush1.msra.mxu0 %v570
      %663 = vmatprep.subr.mxu0 %v569
      %664 = vmatpush1.msra.mxu0 %v568
      %665 = vmatprep.subr.mxu0 %v567
      %666 = vmatpush1.msra.mxu0 %v566
      %667 = vmatprep.subr.mxu0 %v565
      %668 = vmatpush1.msra.mxu0 %v564
      %669 = vmatprep.subr.mxu0 %v563
      %670 = vmatpush1.msra.mxu0 %v562
      %671 = vmatprep.subr.mxu0 %v561
      %672 = vmatpush1.msra.mxu0 %v560
      %673 = vmatprep.subr.mxu0 0.0
      %674 = vmatpush2.msra.mxu0 0.0
      %675 = vmatprep.subr.mxu0 0.0
      %676 = vmatpush2.msra.mxu0 0.0
      %677 = vmatprep.subr.mxu0 0.0
      %678 = vmatpush2.msra.mxu0 0.0
      %679 = vmatprep.subr.mxu0 0.0
      %680 = vmatpush2.msra.mxu0 0.0
      %681 = vmatprep.subr.mxu0 0.0
      %682 = vmatpush2.msra.mxu0 0.0
      %683 = vmatprep.subr.mxu0 0.0
      %684 = vmatpush2.msra.mxu0 0.0
      %685 = vmatprep.subr.mxu0 0.0
      %686 = vmatpush2.msra.mxu0 0.0
      %687 = vmatprep.subr.mxu0 0.0
      %688 = vmatpush2.msra.mxu0 0.0
      %689 = vmatprep.subr.mxu0 0.0
      %690 = vmatpush2.msra.mxu0 0.0
      %691 = vmatprep.subr.mxu0 0.0
      %692 = vmatpush2.msra.mxu0 0.0
      %693 = vmatprep.subr.mxu0 0.0
      %694 = vmatpush2.msra.mxu0 0.0
      %695 = vmatprep.subr.mxu0 0.0
      %696 = vmatpush2.msra.mxu0 0.0
      %697 = vmatprep.subr.mxu0 0.0
      %698 = vmatpush2.msra.mxu0 0.0
      %699 = vmatprep.subr.mxu0 0.0
      %700 = vmatpush2.msra.mxu0 0.0
      %701 = vmatprep.subr.mxu0 0.0
      %702 = vmatpush2.msra.mxu0 0.0
      %703 = vmatprep.subr.mxu0 0.0
      %704 = vmatpush2.msra.mxu0 0.0
      %705 = vmatprep.mubr.f32.mxu0 0.0
      %706 = vmatmul.mubr.f32.gmra.mxu0 %v594
      %v707 = vpop.f32.mrf.mxu0
      %v708 = vadd.f32 0.0, %v707
      %v709 = vpop.f32.mrf.mxu0
      %v710 = vadd.f32 0.0, %v709
      %711 = vmatprep.mubr.f32.mxu0 0.0
      %712 = vmatmul.mubr.f32.gmra.mxu0 %v597
      %v713 = vpop.f32.mrf.mxu0
      %v714 = vadd.f32 0.0, %v713
      %v715 = vpop.f32.mrf.mxu0
      %v716 = vadd.f32 0.0, %v715
      %717 = vmatprep.mubr.f32.mxu0 0.0
      %718 = vmatmul.mubr.f32.gmra.mxu0 %v600
      %v719 = vpop.f32.mrf.mxu0
      %v720 = vadd.f32 0.0, %v719
      %v721 = vpop.f32.mrf.mxu0
      %v722 = vadd.f32 0.0, %v721
      %723 = vmatprep.mubr.f32.mxu0 0.0
      %724 = vmatmul.mubr.f32.gmra.mxu0 %v603
      %v725 = vpop.f32.mrf.mxu0
      %v726 = vadd.f32 0.0, %v725
      %v727 = vpop.f32.mrf.mxu0
      %v728 = vadd.f32 0.0, %v727
      %729 = vmatprep.mubr.f32.mxu0 0.0
      %730 = vmatmul.mubr.f32.gmra.mxu0 %v606
      %v731 = vpop.f32.mrf.mxu0
      %v732 = vadd.f32 0.0, %v731
      %v733 = vpop.f32.mrf.mxu0
      %v734 = vadd.f32 0.0, %v733
      %735 = vmatprep.mubr.f32.mxu0 0.0
      %736 = vmatmul.mubr.f32.gmra.mxu0 %v609
      %v737 = vpop.f32.mrf.mxu0
      %v738 = vadd.f32 0.0, %v737
      %v739 = vpop.f32.mrf.mxu0
      %v740 = vadd.f32 0.0, %v739
      %741 = vmatprep.mubr.f32.mxu0 0.0
      %742 = vmatmul.mubr.f32.gmra.mxu0 %v612
      %v743 = vpop.f32.mrf.mxu0
      %v744 = vadd.f32 0.0, %v743
      %v745 = vpop.f32.mrf.mxu0
      %v746 = vadd.f32 0.0, %v745
      %747 = vmatprep.mubr.f32.mxu0 0.0
      %748 = vmatmul.mubr.f32.gmra.mxu0 %v615
      %v749 = vpop.f32.mrf.mxu0
      %v750 = vadd.f32 0.0, %v749
      %v751 = vpop.f32.mrf.mxu0
      %v752 = vadd.f32 0.0, %v751
      %753 = vmatprep.mubr.f32.mxu0 0.0
      %754 = vmatmul.mubr.f32.gmra.mxu0 %v618
      %v755 = vpop.f32.mrf.mxu0
      %v756 = vadd.f32 0.0, %v755
      %v757 = vpop.f32.mrf.mxu0
      %v758 = vadd.f32 0.0, %v757
      %759 = vmatprep.mubr.f32.mxu0 0.0
      %760 = vmatmul.mubr.f32.gmra.mxu0 %v621
      %v761 = vpop.f32.mrf.mxu0
      %v762 = vadd.f32 0.0, %v761
      %v763 = vpop.f32.mrf.mxu0
      %v764 = vadd.f32 0.0, %v763
      %765 = vmatprep.mubr.f32.mxu0 0.0
      %766 = vmatmul.mubr.f32.gmra.mxu0 %v624
      %v767 = vpop.f32.mrf.mxu0
      %v768 = vadd.f32 0.0, %v767
      %v769 = vpop.f32.mrf.mxu0
      %v770 = vadd.f32 0.0, %v769
      %771 = vmatprep.mubr.f32.mxu0 0.0
      %772 = vmatmul.mubr.f32.gmra.mxu0 %v627
      %v773 = vpop.f32.mrf.mxu0
      %v774 = vadd.f32 0.0, %v773
      %v775 = vpop.f32.mrf.mxu0
      %v776 = vadd.f32 0.0, %v775
      %777 = vmatprep.mubr.f32.mxu0 0.0
      %778 = vmatmul.mubr.f32.gmra.mxu0 %v630
      %v779 = vpop.f32.mrf.mxu0
      %v780 = vadd.f32 0.0, %v779
      %v781 = vpop.f32.mrf.mxu0
      %v782 = vadd.f32 0.0, %v781
      %783 = vmatprep.mubr.f32.mxu0 0.0
      %784 = vmatmul.mubr.f32.gmra.mxu0 %v633
      %v785 = vpop.f32.mrf.mxu0
      %v786 = vadd.f32 0.0, %v785
      %v787 = vpop.f32.mrf.mxu0
      %v788 = vadd.f32 0.0, %v787
      %789 = vmatprep.mubr.f32.mxu0 0.0
      %790 = vmatmul.mubr.f32.gmra.mxu0 %v636
      %v791 = vpop.f32.mrf.mxu0
      %v792 = vadd.f32 0.0, %v791
      %v793 = vpop.f32.mrf.mxu0
      %v794 = vadd.f32 0.0, %v793
      %795 = vmatprep.mubr.f32.mxu0 0.0
      %796 = vmatmul.mubr.f32.gmra.mxu0 %v639
      %v797 = vpop.f32.mrf.mxu0
      %v798 = vadd.f32 0.0, %v797
      %v799 = vpop.f32.mrf.mxu0
      %v800 = vadd.f32 0.0, %v799
      %801 = vdwg.mxu0
      %v802 = vmax.f32 %v708, 0.0
      %v803 = vmax.f32 %v710, 0.0
      %v804 = vmax.f32 %v714, 0.0
      %v805 = vmax.f32 %v716, 0.0
      %v806 = vmax.f32 %v720, 0.0
      %v807 = vmax.f32 %v722, 0.0
      %v808 = vmax.f32 %v726, 0.0
      %v809 = vmax.f32 %v728, 0.0
      %v810 = vmax.f32 %v732, 0.0
      %v811 = vmax.f32 %v734, 0.0
      %v812 = vmax.f32 %v738, 0.0
      %v813 = vmax.f32 %v740, 0.0
      %v814 = vmax.f32 %v744, 0.0
      %v815 = vmax.f32 %v746, 0.0
      %v816 = vmax.f32 %v750, 0.0
      %v817 = vmax.f32 %v752, 0.0
      %v818 = vmax.f32 %v756, 0.0
      %v819 = vmax.f32 %v758, 0.0
      %v820 = vmax.f32 %v762, 0.0
      %v821 = vmax.f32 %v764, 0.0
      %v822 = vmax.f32 %v768, 0.0
      %v823 = vmax.f32 %v770, 0.0
      %v824 = vmax.f32 %v774, 0.0
      %v825 = vmax.f32 %v776, 0.0
      %v826 = vmax.f32 %v780, 0.0
      %v827 = vmax.f32 %v782, 0.0
      %v828 = vmax.f32 %v786, 0.0
      %v829 = vmax.f32 %v788, 0.0
      %v830 = vmax.f32 %v792, 0.0
      %v831 = vmax.f32 %v794, 0.0
      %v832 = vmax.f32 %v798, 0.0
      %v833 = vmax.f32 %v800, 0.0
      %834 = vst [vmem:[%s306] sm:$0xff] %v802
      %835 = vst [vmem:[%s306 + $0x8] sm:$0xff] %v803
      %836 = vst [vmem:[%s306 + $0x10] sm:$0xff] %v804
      %837 = vst [vmem:[%s306 + $0x18] sm:$0xff] %v805
      %838 = vst [vmem:[%s306 + $0x20] sm:$0xff] %v806
      %839 = vst [vmem:[%s306 + $0x28] sm:$0xff] %v807
      %840 = vst [vmem:[%s306 + $0x30] sm:$0xff] %v808
      %841 = vst [vmem:[%s306 + $0x38] sm:$0xff] %v809
      %842 = vst [vmem:[%s306 + $0x40] sm:$0xff] %v810
      %843 = vst [vmem:[%s306 + $0x48] sm:$0xff] %v811
      %844 = vst [vmem:[%s306 + $0x50] sm:$0xff] %v812
      %845 = vst [vmem:[%s306 + $0x58] sm:$0xff] %v813
      %846 = vst [vmem:[%s306 + $0x60] sm:$0xff] %v814
      %847 = vst [vmem:[%s306 + $0x68] sm:$0xff] %v815
      %848 = vst [vmem:[%s306 + $0x70] sm:$0xff] %v816
      %849 = vst [vmem:[%s306 + $0x78] sm:$0xff] %v817
      %850 = vst [vmem:[%s306 + $0x80] sm:$0xff] %v818
      %851 = vst [vmem:[%s306 + $0x88] sm:$0xff] %v819
      %852 = vst [vmem:[%s306 + $0x90] sm:$0xff] %v820
      %853 = vst [vmem:[%s306 + $0x98] sm:$0xff] %v821
      %854 = vst [vmem:[%s306 + $0xa0] sm:$0xff] %v822
      %855 = vst [vmem:[%s306 + $0xa8] sm:$0xff] %v823
      %856 = vst [vmem:[%s306 + $0xb0] sm:$0xff] %v824
      %857 = vst [vmem:[%s306 + $0xb8] sm:$0xff] %v825
      %858 = vst [vmem:[%s306 + $0xc0] sm:$0xff] %v826
      %859 = vst [vmem:[%s306 + $0xc8] sm:$0xff] %v827
      %860 = vst [vmem:[%s306 + $0xd0] sm:$0xff] %v828
      %861 = vst [vmem:[%s306 + $0xd8] sm:$0xff] %v829
      %862 = vst [vmem:[%s306 + $0xe0] sm:$0xff] %v830
      %863 = vst [vmem:[%s306 + $0xe8] sm:$0xff] %v831
      %864 = vst [vmem:[%s306 + $0xf0] sm:$0xff] %v832
      %865 = vst [vmem:[%s306 + $0xf8] sm:$0xff] %v833
      %s866 = smul.u32 2, %s20
      %p867 = scmp.lt.s32.totalorder %s21, 1
      %s868 = scalar_select %p867, %s21, 1
      %p869 = scmp.lt.s32.totalorder %s866, 1
      %s870 = scalar_select %p869, %s866, 1
      %s871 = smul.addr %s868, 32
      %s872 = sadd.s32 %s870, %s871
      %s873 = smul.addr %s872, 8
      %s874 = scalar_lea.vmem %s5, %s873
      // Predicated region
      $region41: #{tpu_custom_call.1} parent=39 // pred_check
        %p875 = pneg %p170
      $region42: #{tpu_custom_call.1} parent=39 // pred_check_branch
        %877 = sbr.rel (%p875) target = $region44
      $region43: #{tpu_custom_call.1} parent=39 // pred_region
        %s878 = smul.u32 2, %s20
      $region44: #{tpu_custom_call.1} parent=39 // pred_fallthru
        _
    $region40: #{tpu_custom_call.1} parent=5 // pred_fallthru
      _
    %p879 = scmp.le.s32.totalorder 2, %s11
    // Predicated region
    $region45: #{tpu_custom_call.1} parent=5 // pred_check
      %p880 = pneg %p879
    $region46: #{tpu_custom_call.1} parent=5 // pred_check_branch
      %882 = sbr.rel (%p880) target = $region48
    $region47: #{tpu_custom_call.1} parent=5 // pred_region
      %s883 = ssub.s32 %s11, 2
      // Predicated region
      $region49: #{tpu_custom_call.1} parent=47 // pred_check
        %p884 = pneg %p176
      $region50: #{tpu_custom_call.1} parent=47 // pred_check_branch
        %886 = sbr.rel (%p884) target = $region52
      $region51: #{tpu_custom_call.1} parent=47 // pred_region
        %s887 = smul.u32 2, %s22
        %p888 = scmp.lt.s32.totalorder %s23, 1
        %s889 = scalar_select %p888, %s23, 1
        %p890 = scmp.lt.s32.totalorder %s887, 1
        %s891 = scalar_select %p890, %s887, 1
        %s892 = smul.addr %s889, 32
        %s893 = sadd.s32 %s891, %s892
        %s894 = smul.addr %s893, 8
        %s895 = scalar_lea.vmem %s5, %s894
      $region52: #{tpu_custom_call.1} parent=47 // pred_fallthru
        _
    $region48: #{tpu_custom_call.1} parent=5 // pred_fallthru
      _
  $region6: #{tpu_custom_call.1} parent=0 // loop_footer
    %s15 = sadd.s32 1, %s11
  $region7: #{tpu_custom_call.1} parent=0 // loop_footer_branch
    %10 = sbr.rel target = $region3
  $region8: #{tpu_custom_call.1} parent=0 // loop_exit
    _

</llo_original>
